<compile_context>
chip_gen: v6e
topology: v6e:2x2x1
jax: 0.10.0
libtpu: 0.0.40
codegen_flags: <defaults>
</compile_context>

<pallas_src>
import jax
import jax.numpy as jnp
from jax.experimental import pallas as pl
from jax.experimental.pallas import tpu as pltpu

ROWS = 3    # matches param.shape[0]
IN_F = 4    # linear in_features
OUT_F = 8   # linear out_features


def net_kernel(x_ref, const_ref, o_ref):
    # x_ref:     (ROWS, IN_F)
    # const_ref: (IN_F + ROWS, OUT_F)
    #              rows 0 .. IN_F-1        -> W^T
    #              rows IN_F .. IN_F+ROWS-1 -> c = param @ W^T + b
    # o_ref:     (ROWS, OUT_F)
    x = x_ref[...]                                      # (ROWS, IN_F)
    const = const_ref[...]                              # (IN_F + ROWS, OUT_F)

    # Seed the accumulator with the precomputed affine block c, then do a
    # fully unrolled K=4 contraction on the VPU (no MXU fill/drain).
    acc = const[IN_F:IN_F + ROWS, :]                    # (ROWS, OUT_F)
    for k in range(IN_F):                               # static Python unroll
        acc = acc + x[:, k:k + 1] * const[k:k + 1, :]

    o_ref[...] = jnp.clip(acc, 0.0, 1.0).astype(o_ref.dtype)   # clamp(0, 1)


def prepare_params(w, b, param):
    """One-time (init-time) prep.

    Packs W^T and the precomputed constant c = param @ W^T + b into a single
    (IN_F + ROWS, OUT_F) operand so the per-call path has exactly two input
    DMAs (x, const_pack) and zero transposes / reshapes / bias adds.
    """
    w_t = w.T                                            # (IN_F, OUT_F)
    c = param @ w_t + b.reshape(1, OUT_F)                # (ROWS, OUT_F)
    return jnp.concatenate([w_t, c], axis=0)             # (IN_F + ROWS, OUT_F)


def net_forward(x, const_pack):
    """x: (ROWS, IN_F); const_pack: (IN_F + ROWS, OUT_F)."""
    vmem = pl.BlockSpec(memory_space=pltpu.MemorySpace.VMEM)
    return pl.pallas_call(
        net_kernel,
        out_shape=jax.ShapeDtypeStruct((ROWS, OUT_F), jnp.float32),
        in_specs=[vmem, vmem],
        out_specs=vmem,
    )(x, const_pack)


if __name__ == "__main__":
    key = jax.random.PRNGKey(0)
    kx, kp, kw, kb = jax.random.split(key, 4)

    # Deterministic synthetic parameters (mirroring __init__ shapes):
    #   self.param = torch.rand(3, 4)         -> uniform [0, 1)
    #   self.linear = torch.nn.Linear(4, 8)   -> W (8, 4), b (8,)
    param = jax.random.uniform(kp, (ROWS, IN_F), dtype=jnp.float32)
    bound = 1.0 / (IN_F ** 0.5)
    w = jax.random.uniform(kw, (OUT_F, IN_F), dtype=jnp.float32,
                           minval=-bound, maxval=bound)
    b = jax.random.uniform(kb, (OUT_F,), dtype=jnp.float32,
                           minval=-bound, maxval=bound)

    # Example input: same 2-D shape the broadcast in forward() implies.
    x = jax.random.normal(kx, (ROWS, IN_F), dtype=jnp.float32)

    const_pack = prepare_params(w, b, param)   # hoisted out of the hot path
    out = jax.block_until_ready(net_forward(x, const_pack))

    # Pure-JAX reference check against the original (un-refolded) formula.
    ref = jnp.clip((x + param) @ w.T + b, 0.0, 1.0)
    assert out.shape == (ROWS, OUT_F)
    assert jnp.allclose(out, ref, atol=1e-5, rtol=1e-5)

    print("KERNEL_OK")
</pallas_src>

<mosaic_0001>
module attributes {stable_mosaic.version = 11 : i64} {
  func.func @net_kernel(%arg0: memref<3x4xf32, #tpu.memory_space<vmem>>, %arg1: memref<7x8xf32, #tpu.memory_space<vmem>>, %arg2: memref<3x8xf32, #tpu.memory_space<vmem>>) attributes {dimension_semantics = [], scalar_prefetch = 0 : i64, scratch_operands = 0 : i64, tpu.core_type = #tpu.core_type<tc>} {
    %c0 = arith.constant 0 : index
    %c0_0 = arith.constant 0 : index
    %0 = vector.load %arg0[%c0, %c0_0] : memref<3x4xf32, #tpu.memory_space<vmem>>, vector<3x4xf32>
    %c0_1 = arith.constant 0 : index
    %c0_2 = arith.constant 0 : index
    %1 = vector.load %arg1[%c0_1, %c0_2] : memref<7x8xf32, #tpu.memory_space<vmem>>, vector<7x8xf32>
    %2 = vector.extract_strided_slice %1 {offsets = [4, 0], sizes = [3, 8], strides = [1, 1]} : vector<7x8xf32> to vector<3x8xf32>
    %3 = vector.extract_strided_slice %0 {offsets = [0, 0], sizes = [3, 1], strides = [1, 1]} : vector<3x4xf32> to vector<3x1xf32>
    %4 = vector.extract_strided_slice %1 {offsets = [0, 0], sizes = [1, 8], strides = [1, 1]} : vector<7x8xf32> to vector<1x8xf32>
    %5 = vector.broadcast %3 : vector<3x1xf32> to vector<3x8xf32>
    %6 = vector.broadcast %4 : vector<1x8xf32> to vector<3x8xf32>
    %7 = arith.mulf %5, %6 : vector<3x8xf32>
    %8 = arith.addf %2, %7 : vector<3x8xf32>
    %9 = vector.extract_strided_slice %0 {offsets = [0, 1], sizes = [3, 1], strides = [1, 1]} : vector<3x4xf32> to vector<3x1xf32>
    %10 = vector.extract_strided_slice %1 {offsets = [1, 0], sizes = [1, 8], strides = [1, 1]} : vector<7x8xf32> to vector<1x8xf32>
    %11 = vector.broadcast %9 : vector<3x1xf32> to vector<3x8xf32>
    %12 = vector.broadcast %10 : vector<1x8xf32> to vector<3x8xf32>
    %13 = arith.mulf %11, %12 : vector<3x8xf32>
    %14 = arith.addf %8, %13 : vector<3x8xf32>
    %15 = vector.extract_strided_slice %0 {offsets = [0, 2], sizes = [3, 1], strides = [1, 1]} : vector<3x4xf32> to vector<3x1xf32>
    %16 = vector.extract_strided_slice %1 {offsets = [2, 0], sizes = [1, 8], strides = [1, 1]} : vector<7x8xf32> to vector<1x8xf32>
    %17 = vector.broadcast %15 : vector<3x1xf32> to vector<3x8xf32>
    %18 = vector.broadcast %16 : vector<1x8xf32> to vector<3x8xf32>
    %19 = arith.mulf %17, %18 : vector<3x8xf32>
    %20 = arith.addf %14, %19 : vector<3x8xf32>
    %21 = vector.extract_strided_slice %0 {offsets = [0, 3], sizes = [3, 1], strides = [1, 1]} : vector<3x4xf32> to vector<3x1xf32>
    %22 = vector.extract_strided_slice %1 {offsets = [3, 0], sizes = [1, 8], strides = [1, 1]} : vector<7x8xf32> to vector<1x8xf32>
    %23 = vector.broadcast %21 : vector<3x1xf32> to vector<3x8xf32>
    %24 = vector.broadcast %22 : vector<1x8xf32> to vector<3x8xf32>
    %25 = arith.mulf %23, %24 : vector<3x8xf32>
    %26 = arith.addf %20, %25 : vector<3x8xf32>
    %cst = arith.constant 0.000000e+00 : f32
    %cst_3 = arith.constant 1.000000e+00 : f32
    %27 = vector.broadcast %cst : f32 to vector<3x8xf32>
    %28 = arith.maximumf %27, %26 : vector<3x8xf32>
    %29 = vector.broadcast %cst_3 : f32 to vector<3x8xf32>
    %30 = arith.minimumf %29, %28 : vector<3x8xf32>
    %c0_4 = arith.constant 0 : index
    %c0_5 = arith.constant 0 : index
    %31 = vector.load %arg2[%c0_4, %c0_5] : memref<3x8xf32, #tpu.memory_space<vmem>>, vector<3x8xf32>
    tpu.vector_store %arg2[%c0_4, %c0_5], %30 {strides = array<i32>} : memref<3x8xf32, #tpu.memory_space<vmem>>, vector<3x8xf32>,
    return
  }
}

</mosaic_0001>

<llo_original>
// kernel: tpu_custom_call.1
$region0: #{tpu_custom_call.1}
  #allocation0 [shape = 'u32[]', space=smem, size = 0x4, offset = 0x4, fixed_abs, tag = 'smem constant byte address 0x4 - core index']
  #allocation1 [shape = 'u32[144,128]{1,0:T(1,128)}', space=vmem, size = 0x12000, scoped, tag = 'internal scratch']
  %s0 = inlined_call_operand.hbm [shape: f32[3,4], index: 0, kind: input, shape index: {}]
  %s1 = inlined_call_operand.hbm [shape: f32[7,8], index: 1, kind: input, shape index: {}]
  %s2 = inlined_call_operand.hbm [shape: f32[3,8], index: 2, kind: output, shape index: {}]
  %s3 = sld [smem:[#allocation0]]
  $region26: #{tpu_custom_call.1} parent=0
    _
  %s5 = ssub.s32 1, %s3
  %s6 = scalar_select 0, %s5, %s3
  $region1: #{tpu_custom_call.1} parent=0
    #allocation2 [shape = 'u8[2048]{0}', space=vmem, size = 0x800, scoped, tag = 'input window, operand 0, single buffered']
    #allocation3 [shape = 's32[1]{0}', space=sflag, size = 0x4, scoped, tag = 'scoped memory for tpu_custom_call.1']
    #allocation4 [shape = 's32[1]{0}', space=sflag, size = 0x4, scoped, tag = 'scoped memory for tpu_custom_call.1']
    #allocation5 [shape = 'u8[4096]{0}', space=vmem, size = 0x1000, scoped, tag = 'input window, operand 1, single buffered']
    #allocation6 [shape = 's32[1]{0}', space=sflag, size = 0x4, scoped, tag = 'scoped memory for tpu_custom_call.1']
    #allocation7 [shape = 'u8[2048]{0}', space=vmem, size = 0x800, scoped, tag = 'output window, operand 0, single buffered']
    %7 = vsyncpa [#allocation3], 0
    %8 = vsyncpa [#allocation6], 0
    %9 = vsyncpa [#allocation4], 0
    // Predicated region
    $region2: #{tpu_custom_call.1} parent=1 // pred_check
      _
    $region3: #{tpu_custom_call.1} parent=1 // pred_check_branch
      %11 = sbr.rel (0) target = $region5
    $region4: #{tpu_custom_call.1} parent=1 // pred_region
      %s13 = ssub.s32 64, 64
      %14 = vsyncadd [#allocation3], %s13
      %s16 = sshll.u32 [#allocation2], 4
      %s17 = int_to_ptr.vmem [resolvable:$true] %s16
      %19 = dma.hbm_to_vmem [thread:$0]  %s0, 64, %s17, [#allocation3]
    $region5: #{tpu_custom_call.1} parent=1 // pred_fallthru
      _
    // Predicated region
    $region6: #{tpu_custom_call.1} parent=1 // pred_check
      _
    $region7: #{tpu_custom_call.1} parent=1 // pred_check_branch
      %21 = sbr.rel (0) target = $region9
    $region8: #{tpu_custom_call.1} parent=1 // pred_region
      %s23 = ssub.s32 128, 128
      %24 = vsyncadd [#allocation6], %s23
      %s26 = sshll.u32 [#allocation5], 4
      %s27 = int_to_ptr.vmem [resolvable:$true] %s26
      %29 = dma.hbm_to_vmem [thread:$0]  %s1, 128, %s27, [#allocation6]
    $region9: #{tpu_custom_call.1} parent=1 // pred_fallthru
      _
    // Predicated region
    $region10: #{tpu_custom_call.1} parent=1 // pred_check
      _
    $region11: #{tpu_custom_call.1} parent=1 // pred_check_branch
      %31 = sbr.rel (0) target = $region13
    $region12: #{tpu_custom_call.1} parent=1 // pred_region
      %32 = dma.done [#allocation3], 64
    $region13: #{tpu_custom_call.1} parent=1 // pred_fallthru
      _
    // Predicated region
    $region14: #{tpu_custom_call.1} parent=1 // pred_check
      _
    $region15: #{tpu_custom_call.1} parent=1 // pred_check_branch
      %34 = sbr.rel (0) target = $region17
    $region16: #{tpu_custom_call.1} parent=1 // pred_region
      %35 = dma.done [#allocation6], 128
    $region17: #{tpu_custom_call.1} parent=1 // pred_fallthru
      _
    %v36 = vld [vmem:[#allocation2] sm:$0x7]
    %v37 = vld [vmem:[#allocation5] sm:$0x7f]
    %39 = vset.pattern.permute.xlu0 0
    %40 = vperm.xlu0 %39, %v36
    %v41 = vpop.permute.xlu0 %40
    %v43 = vlaneseq
    %v44 = vshrl.u32 %v43, 7
    %v45 = vsub.s32 0, %v44
    %v46 = vrot.slane %v37, %v45
    %v47 = vmul.f32 %v41, %v46
    %v49 = vrot.slane %v47, 4
    %v51 = vadd.f32 %v37, %v49
    %52 = vset.pattern.permute.xlu0 1
    %53 = vperm.xlu0 %52, %v36
    %v54 = vpop.permute.xlu0 %53
    %v56 = vlaneseq
    %v57 = vshrl.u32 %v56, 7
    %v58 = vsub.s32 1, %v57
    %v59 = vrot.slane %v37, %v58
    %v60 = vmul.f32 %v54, %v59
    %v62 = vrot.slane %v60, 4
    %v64 = vadd.f32 %v51, %v62
    %65 = vset.pattern.permute.xlu0 2
    %66 = vperm.xlu0 %65, %v36
    %v67 = vpop.permute.xlu0 %66
    %v69 = vlaneseq
    %v70 = vshrl.u32 %v69, 7
    %v71 = vsub.s32 2, %v70
    %v72 = vrot.slane %v37, %v71
    %v73 = vmul.f32 %v67, %v72
    %v75 = vrot.slane %v73, 4
    %v77 = vadd.f32 %v64, %v75
    %78 = vset.pattern.permute.xlu0 3
    %79 = vperm.xlu0 %78, %v36
    %v80 = vpop.permute.xlu0 %79
    %v82 = vlaneseq
    %v83 = vshrl.u32 %v82, 7
    %v84 = vsub.s32 3, %v83
    %v85 = vrot.slane %v37, %v84
    %v86 = vmul.f32 %v80, %v85
    %v88 = vrot.slane %v86, 4
    %v90 = vadd.f32 %v77, %v88
    %v91 = vmax.f32 %v90, 0.0
    %v92 = vmin.f32 %v91, 1.0
    %vm93 = vcmask 63492
    %94 = vst.msk [vmem:[#allocation7 - $0x4] sm:$0x70] %vm93, %v92
    // Predicated region
    $region18: #{tpu_custom_call.1} parent=1 // pred_check
      _
    $region19: #{tpu_custom_call.1} parent=1 // pred_check_branch
      %96 = sbr.rel (0) target = $region21
    $region20: #{tpu_custom_call.1} parent=1 // pred_region
      %s98 = ssub.s32 64, 64
      %99 = vsyncadd [#allocation4], %s98
      %s101 = sshll.u32 [#allocation7], 4
      %s102 = int_to_ptr.vmem [resolvable:$true] %s101
      %104 = dma.vmem_to_hbm [thread:$0]  %s102, 64, %s2, [#allocation4]
    $region21: #{tpu_custom_call.1} parent=1 // pred_fallthru
      _
    // Predicated region
    $region22: #{tpu_custom_call.1} parent=1 // pred_check
      _
    $region23: #{tpu_custom_call.1} parent=1 // pred_check_branch
      %106 = sbr.rel (0) target = $region25
    $region24: #{tpu_custom_call.1} parent=1 // pred_region
      %107 = dma.done [#allocation4], 64
    $region25: #{tpu_custom_call.1} parent=1 // pred_fallthru
      _
    %108 = vsyncpa [#allocation3], 1
    %109 = vsyncpa [#allocation6], 1
    %110 = vsyncpa [#allocation4], 1

</llo_original>
